<compile_context>
chip_gen: v6e
topology: v6e:2x2x1
jax: 0.10.0
libtpu: 0.0.40
codegen_flags: <defaults>
</compile_context>

<pallas_src>
import jax
import jax.numpy as jnp
from jax.experimental import pallas as pl
from jax.experimental.pallas import tpu as pltpu


# ---------------------------------------------------------------------------
# Single fused GEMM kernel (whole problem in one grid step)
# ---------------------------------------------------------------------------
def _gemm_kernel(a_ref, b_ref, o_ref):
    # a_ref: [Mp, Kp]  bf16   (im2col'd activations, K zero-padded)
    # b_ref: [Kp, Cp]  bf16   (reshaped weights, K & Cout zero-padded)
    # o_ref: [Mp, Cp]  f32    (dense slab; un-padded/re-laid-out outside)
    o_ref[...] = jnp.dot(a_ref[...], b_ref[...],
                         preferred_element_type=jnp.float32)


# ---------------------------------------------------------------------------
# Conv2d wrapper (stride=3, padding=2, dilation=1, groups=1, no bias)
# ---------------------------------------------------------------------------
def conv2d_pallas(x_nchw, w_oihw, *, stride=(3, 3), padding=(2, 2),
                  dilation=(1, 1)):
    N, Cin, H, W = x_nchw.shape
    Cout, Cin_w, KH, KW = w_oihw.shape
    assert Cin == Cin_w, "groups=1 only"
    sh, sw = stride
    ph, pw = padding
    dh, dw = dilation
    assert (dh, dw) == (1, 1), "dilation=1 only (module spec)"

    Ho = (H + 2 * ph - dh * (KH - 1) - 1) // sh + 1
    Wo = (W + 2 * pw - dw * (KW - 1) - 1) // sw + 1
    Hneed = sh * (Ho - 1) + KH          # last padded row read + 1
    Wneed = sw * (Wo - 1) + KW          # last padded col read + 1

    # ---- XLA glue on few-KiB tensors: NHWC + halo pad + im2col fold --------
    x = jnp.transpose(x_nchw, (0, 2, 3, 1))                        # NHWC
    x = jnp.pad(x, ((0, 0),
                    (ph, max(0, Hneed - ph - H)),
                    (pw, max(0, Wneed - pw - W)),
                    (0, 0)))[:, :Hneed, :Wneed, :]

    if sh == KH and sw == KW:
        # stride == kernel in both dims: im2col is a pure reshape + tiny
        # transpose (no data duplication).
        cols = x.reshape(N, Ho, KH, Wo, KW, Cin)
        cols = jnp.transpose(cols, (0, 1, 3, 2, 4, 5))  # (N,Ho,Wo,KH,KW,Cin)
    else:
        # TODO(synk): general stride != kernel path uses a strided-slice
        # gather (data duplicated KH*KW times); fine at these sizes.
        cols = jnp.stack(
            [jnp.stack([x[:, kh:kh + sh * Ho:sh, kw:kw + sw * Wo:sw, :]
                        for kw in range(KW)], axis=3)
             for kh in range(KH)], axis=3)               # (N,Ho,Wo,KH,KW,Cin)

    Kdim = KH * KW * Cin
    M = N * Ho * Wo
    Kp = ((Kdim + 127) // 128) * 128     # lane-dense, full-K MXU pass
    Cp = ((Cout + 127) // 128) * 128     # lane-dense output stores
    Mp = ((M + 7) // 8) * 8              # sublane-aligned rows

    lhs = cols.reshape(M, Kdim).astype(jnp.bfloat16)
    lhs = jnp.pad(lhs, ((0, Mp - M), (0, Kp - Kdim)))

    # Weight [Cout,Cin,KH,KW] -> [KH,KW,Cin,Cout] -> [Kdim,Cout], padded.
    rhs = jnp.transpose(w_oihw, (2, 3, 1, 0)).reshape(Kdim, Cout)
    rhs = jnp.pad(rhs, ((0, Kp - Kdim), (0, Cp - Cout))).astype(jnp.bfloat16)

    out = pl.pallas_call(
        _gemm_kernel,
        out_shape=jax.ShapeDtypeStruct((Mp, Cp), jnp.float32),
        grid_spec=pltpu.PrefetchScalarGridSpec(
            num_scalar_prefetch=0,
            grid=(1,),
            in_specs=[
                pl.BlockSpec((Mp, Kp), lambda i: (0, 0)),
                pl.BlockSpec((Kp, Cp), lambda i: (0, 0)),
            ],
            out_specs=pl.BlockSpec((Mp, Cp), lambda i: (0, 0)),
        ),
    )(lhs, rhs)

    # Un-pad, restore NCHW (few KiB; negligible).
    out = out[:M, :Cout].reshape(N, Ho, Wo, Cout)
    return jnp.transpose(out, (0, 3, 1, 2))


# ---------------------------------------------------------------------------
if __name__ == "__main__":
    key = jax.random.PRNGKey(0)
    kx, kw = jax.random.split(key)

    # Module takes (inputVec, weight) as runtime args -> deterministic synth.
    x = jax.random.normal(kx, (2, 4, 16, 16), dtype=jnp.float32)   # NCHW
    w = jax.random.normal(kw, (8, 4, 3, 3), dtype=jnp.float32)     # OIHW

    y = jax.block_until_ready(
        conv2d_pallas(x, w, stride=(3, 3), padding=(2, 2)))

    # Tight reference: f32 conv on bf16-rounded inputs (same products as the
    # bf16 MXU path, f32 accumulation) -> should match to ~1e-6.
    x_b = x.astype(jnp.bfloat16).astype(jnp.float32)
    w_b = w.astype(jnp.bfloat16).astype(jnp.float32)
    y_ref_tight = jax.lax.conv_general_dilated(
        x_b, w_b, window_strides=(3, 3), padding=((2, 2), (2, 2)),
        dimension_numbers=("NCHW", "OIHW", "NCHW"),
        precision=jax.lax.Precision.HIGHEST)

    # Loose reference: true f32 module semantics (tolerance relaxed because
    # the MXU path rounds inputs to bf16).
    y_ref_f32 = jax.lax.conv_general_dilated(
        x, w, window_strides=(3, 3), padding=((2, 2), (2, 2)),
        dimension_numbers=("NCHW", "OIHW", "NCHW"),
        precision=jax.lax.Precision.HIGHEST)

    assert y.shape == y_ref_f32.shape == (2, 8, 6, 6)
    assert jnp.allclose(y, y_ref_tight, atol=2e-3, rtol=2e-3)
    assert jnp.allclose(y, y_ref_f32, atol=2e-1, rtol=2e-2)

    print("KERNEL_OK")
</pallas_src>

<mosaic_0001>
module attributes {stable_mosaic.version = 11 : i64} {
  func.func @_gemm_kernel(%arg0: i32, %arg1: memref<72x128xbf16, #tpu.memory_space<vmem>>, %arg2: memref<128x128xbf16, #tpu.memory_space<vmem>>, %arg3: memref<72x128xf32, #tpu.memory_space<vmem>>) attributes {dimension_semantics = [#tpu.dimension_semantics<arbitrary>], iteration_bounds = array<i64: 1>, scalar_prefetch = 0 : i64, scratch_operands = 0 : i64, tpu.core_type = #tpu.core_type<tc>, window_params = [{pipeline_mode = #tpu.pipeline_mode<synchronous>, transform_indices = @transform_0, window_bounds = array<i64: 72, 128>}, {pipeline_mode = #tpu.pipeline_mode<synchronous>, transform_indices = @transform_1, window_bounds = array<i64: 128, 128>}, {pipeline_mode = #tpu.pipeline_mode<synchronous>, transform_indices = @transform_2, window_bounds = array<i64: 72, 128>}]} {
    %c0 = arith.constant 0 : index
    %c0_0 = arith.constant 0 : index
    %0 = vector.load %arg1[%c0, %c0_0] : memref<72x128xbf16, #tpu.memory_space<vmem>>, vector<72x128xbf16>
    %c0_1 = arith.constant 0 : index
    %c0_2 = arith.constant 0 : index
    %1 = vector.load %arg2[%c0_1, %c0_2] : memref<128x128xbf16, #tpu.memory_space<vmem>>, vector<128x128xbf16>
    %cst = arith.constant dense<0.000000e+00> : vector<72x128xf32>
    %2 = tpu.matmul %0, %1, %cst {dimension_numbers = #tpu.dot_dimension_numbers<[1], [0], [0], [1], [0, 0, 1, 1], [], []>} : vector<72x128xbf16>, vector<128x128xbf16>, vector<72x128xf32> -> vector<72x128xf32>
    %c0_3 = arith.constant 0 : index
    %c0_4 = arith.constant 0 : index
    %3 = vector.load %arg3[%c0_3, %c0_4] : memref<72x128xf32, #tpu.memory_space<vmem>>, vector<72x128xf32>
    tpu.vector_store %arg3[%c0_3, %c0_4], %2 {strides = array<i32>} : memref<72x128xf32, #tpu.memory_space<vmem>>, vector<72x128xf32>,
    return
  }
  func.func @transform_0(%arg0: i32) -> (i32, i32) {
    %c0_i32 = arith.constant 0 : i32
    %c0_i32_0 = arith.constant 0 : i32
    %c0_i32_1 = arith.constant 0 : i32
    return %c0_i32, %c0_i32_0 : i32, i32
  }
  func.func @transform_1(%arg0: i32) -> (i32, i32) {
    %c0_i32 = arith.constant 0 : i32
    %c0_i32_0 = arith.constant 0 : i32
    %c0_i32_1 = arith.constant 0 : i32
    return %c0_i32, %c0_i32_0 : i32, i32
  }
  func.func @transform_2(%arg0: i32) -> (i32, i32) {
    %c0_i32 = arith.constant 0 : i32
    %c0_i32_0 = arith.constant 0 : i32
    %c0_i32_1 = arith.constant 0 : i32
    return %c0_i32, %c0_i32_0 : i32, i32
  }
}

</mosaic_0001>

<llo_original>
// kernel: tpu_custom_call.1
$region0: #{tpu_custom_call.1}
  #allocation0 [shape = 'u32[]', space=smem, size = 0x4, offset = 0x4, fixed_abs, tag = 'smem constant byte address 0x4 - core index']
  #allocation1 [shape = 'u32[144,128]{1,0:T(1,128)}', space=vmem, size = 0x12000, scoped, tag = 'internal scratch']
  %s0 = inlined_call_operand.hbm [shape: bf16[72,128], index: 0, kind: input, shape index: {}]
  %s1 = inlined_call_operand.hbm [shape: bf16[128,128], index: 1, kind: input, shape index: {}]
  %s2 = inlined_call_operand.hbm [shape: f32[72,128], index: 2, kind: output, shape index: {}]
  %s3 = sld [smem:[#allocation0]]
  $region26: #{tpu_custom_call.1} parent=0
    _
  %s5 = ssub.s32 1, %s3
  %s6 = scalar_select 0, %s5, %s3
  $region1: #{tpu_custom_call.1} parent=0
    #allocation2 [shape = 'u8[18432]{0}', space=vmem, size = 0x4800, scoped, tag = 'input window, operand 0, single buffered']
    #allocation3 [shape = 's32[1]{0}', space=sflag, size = 0x4, scoped, tag = 'scoped memory for tpu_custom_call.1']
    #allocation4 [shape = 's32[1]{0}', space=sflag, size = 0x4, scoped, tag = 'scoped memory for tpu_custom_call.1']
    #allocation5 [shape = 'u8[32768]{0}', space=vmem, size = 0x8000, scoped, tag = 'input window, operand 1, single buffered']
    #allocation6 [shape = 's32[1]{0}', space=sflag, size = 0x4, scoped, tag = 'scoped memory for tpu_custom_call.1']
    #allocation7 [shape = 'u8[36864]{0}', space=vmem, size = 0x9000, scoped, tag = 'output window, operand 0, single buffered']
    %7 = vsyncpa [#allocation3], 0
    %8 = vsyncpa [#allocation6], 0
    %9 = vsyncpa [#allocation4], 0
    // Predicated region
    $region2: #{tpu_custom_call.1} parent=1 // pred_check
      _
    $region3: #{tpu_custom_call.1} parent=1 // pred_check_branch
      %11 = sbr.rel (0) target = $region5
    $region4: #{tpu_custom_call.1} parent=1 // pred_region
      %s13 = ssub.s32 576, 576
      %14 = vsyncadd [#allocation3], %s13
      %s15 = sshll.u32 [#allocation2], 4
      %s16 = int_to_ptr.vmem [resolvable:$true] %s15
      %21 = dma.hbm_to_vmem [thread:$0]  %s0, 576, %s16, [#allocation3], 64, 64, 4
    $region5: #{tpu_custom_call.1} parent=1 // pred_fallthru
      _
    // Predicated region
    $region6: #{tpu_custom_call.1} parent=1 // pred_check
      _
    $region7: #{tpu_custom_call.1} parent=1 // pred_check_branch
      %23 = sbr.rel (0) target = $region9
    $region8: #{tpu_custom_call.1} parent=1 // pred_region
      %s25 = ssub.s32 1024, 1024
      %26 = vsyncadd [#allocation6], %s25
      %s27 = sshll.u32 [#allocation5], 4
      %s28 = int_to_ptr.vmem [resolvable:$true] %s27
      %33 = dma.hbm_to_vmem [thread:$0]  %s1, 1024, %s28, [#allocation6], 64, 64, 4
    $region9: #{tpu_custom_call.1} parent=1 // pred_fallthru
      _
    // Predicated region
    $region10: #{tpu_custom_call.1} parent=1 // pred_check
      _
    $region11: #{tpu_custom_call.1} parent=1 // pred_check_branch
      %35 = sbr.rel (0) target = $region13
    $region12: #{tpu_custom_call.1} parent=1 // pred_region
      %36 = dma.done [#allocation3], 576
    $region13: #{tpu_custom_call.1} parent=1 // pred_fallthru
      _
    // Predicated region
    $region14: #{tpu_custom_call.1} parent=1 // pred_check
      _
    $region15: #{tpu_custom_call.1} parent=1 // pred_check_branch
      %38 = sbr.rel (0) target = $region17
    $region16: #{tpu_custom_call.1} parent=1 // pred_region
      %39 = dma.done [#allocation6], 1024
    $region17: #{tpu_custom_call.1} parent=1 // pred_fallthru
      _
    %v41 = vld [vmem:[#allocation2] sm:$0xf]
    %v42 = vld [vmem:[#allocation2 + $0x4] sm:$0xf]
    %v43 = vld [vmem:[#allocation2 + $0x8] sm:$0xf]
    %v44 = vld [vmem:[#allocation2 + $0xc] sm:$0xf]
    %v45 = vld [vmem:[#allocation2 + $0x10] sm:$0xf]
    %v46 = vld [vmem:[#allocation2 + $0x14] sm:$0xf]
    %v47 = vld [vmem:[#allocation2 + $0x18] sm:$0xf]
    %v48 = vld [vmem:[#allocation2 + $0x1c] sm:$0xf]
    %v49 = vld [vmem:[#allocation2 + $0x20] sm:$0xf]
    %v50 = vld [vmem:[#allocation5] sm:$0xf]
    %v51 = vld [vmem:[#allocation5 + $0x4] sm:$0xf]
    %v52 = vld [vmem:[#allocation5 + $0x8] sm:$0xf]
    %v53 = vld [vmem:[#allocation5 + $0xc] sm:$0xf]
    %v54 = vld [vmem:[#allocation5 + $0x10] sm:$0xf]
    %v55 = vld [vmem:[#allocation5 + $0x14] sm:$0xf]
    %v56 = vld [vmem:[#allocation5 + $0x18] sm:$0xf]
    %v57 = vld [vmem:[#allocation5 + $0x1c] sm:$0xf]
    %v58 = vld [vmem:[#allocation5 + $0x20] sm:$0xf]
    %v59 = vld [vmem:[#allocation5 + $0x24] sm:$0xf]
    %v60 = vld [vmem:[#allocation5 + $0x28] sm:$0xf]
    %v61 = vld [vmem:[#allocation5 + $0x2c] sm:$0xf]
    %v62 = vld [vmem:[#allocation5 + $0x30] sm:$0xf]
    %v63 = vld [vmem:[#allocation5 + $0x34] sm:$0xf]
    %v64 = vld [vmem:[#allocation5 + $0x38] sm:$0xf]
    %v65 = vld [vmem:[#allocation5 + $0x3c] sm:$0xf]
    %v75 = vunpack.c.l.b16 %v41
    %v76 = vunpack.c.l.b16 %v42
    %v77 = vunpack.c.l.b16 %v43
    %v78 = vunpack.c.l.b16 %v44
    %v79 = vunpack.c.l.b16 %v45
    %v80 = vunpack.c.l.b16 %v46
    %v81 = vunpack.c.l.b16 %v47
    %v82 = vunpack.c.l.b16 %v48
    %v83 = vunpack.c.l.b16 %v49
    %v84 = vpack.c.b16 %v76, %v75
    %v85 = vpack.c.b16 %v78, %v77
    %v86 = vpack.c.b16 %v80, %v79
    %v87 = vpack.c.b16 %v82, %v81
    %v88 = vpack.c.b16 %v83, %v83
    %v110 = vunpack.c.l.b16 %v50
    %v111 = vunpack.c.l.b16 %v51
    %v112 = vunpack.c.l.b16 %v52
    %v113 = vunpack.c.l.b16 %v53
    %v114 = vunpack.c.l.b16 %v54
    %v115 = vunpack.c.l.b16 %v55
    %v116 = vunpack.c.l.b16 %v56
    %v117 = vunpack.c.l.b16 %v57
    %v118 = vunpack.c.l.b16 %v58
    %v119 = vunpack.c.l.b16 %v59
    %v120 = vunpack.c.l.b16 %v60
    %v121 = vunpack.c.l.b16 %v61
    %v122 = vunpack.c.l.b16 %v62
    %v123 = vunpack.c.l.b16 %v63
    %v124 = vunpack.c.l.b16 %v64
    %v125 = vunpack.c.l.b16 %v65
    %v126 = vpack.c.b16 %v111, %v110
    %v127 = vpack.c.b16 %v113, %v112
    %v128 = vpack.c.b16 %v115, %v114
    %v129 = vpack.c.b16 %v117, %v116
    %v130 = vpack.c.b16 %v119, %v118
    %v131 = vpack.c.b16 %v121, %v120
    %v132 = vpack.c.b16 %v123, %v122
    %v133 = vpack.c.b16 %v125, %v124
    %142 = vmatprep.subr.bf16.mxu0 0
    %143 = vmatpush1.bf16.msra.mxu0 %v133
    %144 = vmatprep.subr.bf16.mxu0 0
    %145 = vmatpush1.bf16.msra.mxu0 %v132
    %146 = vmatprep.subr.bf16.mxu0 0
    %147 = vmatpush1.bf16.msra.mxu0 %v131
    %148 = vmatprep.subr.bf16.mxu0 0
    %149 = vmatpush1.bf16.msra.mxu0 %v130
    %150 = vmatprep.subr.bf16.mxu0 0
    %151 = vmatpush1.bf16.msra.mxu0 %v129
    %152 = vmatprep.subr.bf16.mxu0 0
    %153 = vmatpush1.bf16.msra.mxu0 %v128
    %154 = vmatprep.subr.bf16.mxu0 0
    %155 = vmatpush1.bf16.msra.mxu0 %v127
    %156 = vmatprep.subr.bf16.mxu0 0
    %157 = vmatpush1.bf16.msra.mxu0 %v126
    %158 = vmatprep.subr.bf16.mxu0 0
    %159 = vmatpush2.bf16.msra.mxu0 0
    %160 = vmatprep.subr.bf16.mxu0 0
    %161 = vmatpush2.bf16.msra.mxu0 0
    %162 = vmatprep.subr.bf16.mxu0 0
    %163 = vmatpush2.bf16.msra.mxu0 0
    %164 = vmatprep.subr.bf16.mxu0 0
    %165 = vmatpush2.bf16.msra.mxu0 0
    %166 = vmatprep.subr.bf16.mxu0 0
    %167 = vmatpush2.bf16.msra.mxu0 0
    %168 = vmatprep.subr.bf16.mxu0 0
    %169 = vmatpush2.bf16.msra.mxu0 0
    %170 = vmatprep.subr.bf16.mxu0 0
    %171 = vmatpush2.bf16.msra.mxu0 0
    %172 = vmatprep.subr.bf16.mxu0 0
    %173 = vmatpush2.bf16.msra.mxu0 0
    %174 = vmatprep.mubr.bf16.mxu0 0
    %175 = vmatmul.mubr.bf16.gmra.mxu0 %v84
    %v176 = vpop.f32.mrf.mxu0
    %v177 = vadd.f32 0.0, %v176
    %v178 = vpop.f32.mrf.mxu0
    %v179 = vpop.f32.mrf.mxu0
    %v180 = vadd.f32 0.0, %v179
    %v181 = vpop.f32.mrf.mxu0
    %182 = vmatprep.mubr.bf16.mxu0 0
    %183 = vmatmul.mubr.bf16.gmra.mxu0 %v85
    %v184 = vpop.f32.mrf.mxu0
    %v185 = vadd.f32 0.0, %v184
    %v186 = vpop.f32.mrf.mxu0
    %v187 = vpop.f32.mrf.mxu0
    %v188 = vadd.f32 0.0, %v187
    %v189 = vpop.f32.mrf.mxu0
    %190 = vmatprep.mubr.bf16.mxu0 0
    %191 = vmatmul.mubr.bf16.gmra.mxu0 %v86
    %v192 = vpop.f32.mrf.mxu0
    %v193 = vadd.f32 0.0, %v192
    %v194 = vpop.f32.mrf.mxu0
    %v195 = vpop.f32.mrf.mxu0
    %v196 = vadd.f32 0.0, %v195
    %v197 = vpop.f32.mrf.mxu0
    %198 = vmatprep.mubr.bf16.mxu0 0
    %199 = vmatmul.mubr.bf16.gmra.mxu0 %v87
    %v200 = vpop.f32.mrf.mxu0
    %v201 = vadd.f32 0.0, %v200
    %v202 = vpop.f32.mrf.mxu0
    %v203 = vpop.f32.mrf.mxu0
    %v204 = vadd.f32 0.0, %v203
    %v205 = vpop.f32.mrf.mxu0
    %206 = vmatprep.mubr.bf16.mxu0 0
    %207 = vmatmul.mubr.bf16.gmra.mxu0 %v88
    %v208 = vpop.f32.mrf.mxu0
    %v209 = vadd.f32 0.0, %v208
    %v210 = vpop.f32.mrf.mxu0
    %v211 = vpop.f32.mrf.mxu0
    %v212 = vpop.f32.mrf.mxu0
    %213 = vdwg.mxu0
    %214 = vst [vmem:[#allocation7] sm:$0xff] %v177
    %215 = vst [vmem:[#allocation7 + $0x8] sm:$0xff] %v180
    %216 = vst [vmem:[#allocation7 + $0x10] sm:$0xff] %v185
    %217 = vst [vmem:[#allocation7 + $0x18] sm:$0xff] %v188
    %218 = vst [vmem:[#allocation7 + $0x20] sm:$0xff] %v193
    %219 = vst [vmem:[#allocation7 + $0x28] sm:$0xff] %v196
    %220 = vst [vmem:[#allocation7 + $0x30] sm:$0xff] %v201
    %221 = vst [vmem:[#allocation7 + $0x38] sm:$0xff] %v204
    %222 = vst [vmem:[#allocation7 + $0x40] sm:$0xff] %v209
    // Predicated region
    $region18: #{tpu_custom_call.1} parent=1 // pred_check
      _
    $region19: #{tpu_custom_call.1} parent=1 // pred_check_branch
      %224 = sbr.rel (0) target = $region21
    $region20: #{tpu_custom_call.1} parent=1 // pred_region
      %s226 = ssub.s32 1152, 1152
      %227 = vsyncadd [#allocation4], %s226
      %s228 = sshll.u32 [#allocation7], 4
      %s229 = int_to_ptr.vmem [resolvable:$true] %s228
      %234 = dma.vmem_to_hbm [thread:$0]  %s229, 1152, %s2, [#allocation4], 128, 128, 8
    $region21: #{tpu_custom_call.1} parent=1 // pred_fallthru
      _
    // Predicated region
    $region22: #{tpu_custom_call.1} parent=1 // pred_check
      _
    $region23: #{tpu_custom_call.1} parent=1 // pred_check_branch
      %236 = sbr.rel (0) target = $region25
    $region24: #{tpu_custom_call.1} parent=1 // pred_region
      %237 = dma.done [#allocation4], 1152
    $region25: #{tpu_custom_call.1} parent=1 // pred_fallthru
      _
    %238 = vsyncpa [#allocation3], 1
    %239 = vsyncpa [#allocation6], 1
    %240 = vsyncpa [#allocation4], 1

</llo_original>
